<compile_context>
chip_gen: v7x
topology: tpu7x:2x2x1
jax: 0.10.0
libtpu: 0.0.40
codegen_flags: <defaults>
</compile_context>

<pallas_src>
import jax
import jax.numpy as jnp
from jax import lax
from jax.experimental import pallas as pl
from jax.experimental.pallas import tpu as pltpu


def _round_up(x: int, m: int) -> int:
    return ((x + m - 1) // m) * m


def _detect_tpu():
    """Best-effort (tensorcores_per_device, per-core VMEM capacity bytes)."""
    kind = ""
    try:
        kind = jax.devices()[0].device_kind.lower()
    except Exception:
        pass
    is_v7 = ("v7" in kind) or ("7x" in kind)

    vmem_cap = None
    try:
        vmem_cap = int(pltpu.get_tpu_info().vmem_capacity_bytes)
    except Exception:
        vmem_cap = None
    if vmem_cap is None or vmem_cap <= 0:
        vmem_cap = (64 << 20) if is_v7 else (128 << 20)
    if is_v7:
        # v7x has 64 MiB per TensorCore; never assume more even if the query
        # reports a per-chip aggregate.
        vmem_cap = min(vmem_cap, 64 << 20)

    num_cores = 2 if is_v7 else 1
    return num_cores, vmem_cap


def _make_kernel(m_total: int, tm: int, tiles_per_split: int, chunk: int, f: int):
    """Kernel factory; all tiling parameters are baked in as Python ints."""
    n_chunks = tm // chunk

    def kernel(x_ref, y_ref, num_ref, den_ref):
        c = pl.program_id(0)  # per-core split
        t = pl.program_id(1)  # reduction over row tiles

        @pl.when(t == 0)
        def _():
            num_ref[...] = jnp.zeros_like(num_ref)
            den_ref[...] = jnp.zeros_like(den_ref)

        # First global row this block logically covers. Rows at or beyond
        # m_total hold unspecified data (partial last tile / clamped
        # out-of-range split tile) and are masked to zero below.
        row0 = (c * tiles_per_split + t) * tm
        valid = m_total - row0  # may be <= 0 or > tm

        def body(i, carry):
            num_acc, den_acc = carry
            start = pl.multiple_of(i * chunk, chunk)
            x = x_ref[pl.ds(start, chunk), :].astype(jnp.float32)
            y = y_ref[pl.ds(start, chunk), :].astype(jnp.float32)
            rid = lax.broadcasted_iota(jnp.int32, (chunk, 1), 0)
            mask = rid < (valid - start)
            d = y - x
            dd = jnp.where(mask, d * d, 0.0)
            yy = jnp.where(mask, y * y, 0.0)
            # Fold rows into sublane groups of 8: the axis-0 sum is pure VPU
            # vreg adds (no XLU cross-lane reduction in the steady state).
            num_acc = num_acc + jnp.sum(dd.reshape(chunk // 8, 8, f), axis=0)
            den_acc = den_acc + jnp.sum(yy.reshape(chunk // 8, 8, f), axis=0)
            return num_acc, den_acc

        zero = jnp.zeros((8, f), jnp.float32)
        num_acc, den_acc = lax.fori_loop(0, n_chunks, body, (zero, zero))
        num_ref[...] += num_acc
        den_ref[...] += den_acc

    return kernel


def spectral_convergence_loss(
    x_mag: jax.Array,
    y_mag: jax.Array,
    *,
    target_block_bytes: int | None = None,
) -> jax.Array:
    """Pallas implementation of SpectralConvergenceLoss.forward.

    Args:
      x_mag: (B, T, F) predicted magnitude spectrogram (f32 or bf16).
      y_mag: (B, T, F) ground-truth magnitude spectrogram (same shape/dtype).
      target_block_bytes: optional override of the per-input VMEM block size
        (mainly for testing the multi-tile / tail-masking path).
    Returns:
      scalar float32 loss.
    """
    assert x_mag.shape == y_mag.shape, (x_mag.shape, y_mag.shape)
    assert x_mag.dtype == y_mag.dtype, (x_mag.dtype, y_mag.dtype)
    B, T, F = x_mag.shape
    M = B * T
    N = M * F

    # Flatten (B, T) -> one contiguous row axis (free: merges leading dims).
    x2 = x_mag.reshape(M, F)
    y2 = y_mag.reshape(M, F)

    itemsize = x_mag.dtype.itemsize
    sublane = max(8, 32 // itemsize)          # 8 rows f32, 16 rows bf16
    lane_tiles = pl.cdiv(F, 128)
    f_pad = lane_tiles * 128                  # VMEM lane-padded width

    num_cores, vmem_cap = _detect_tpu()

    # --- block sizing: double-buffered 2-input working set must fit VMEM ---
    headroom = 16 << 20
    usable = max(8 << 20, vmem_cap - headroom)
    block_budget = min(usable // 4, 24 << 20)          # 2 inputs x 2 buffers
    if target_block_bytes is not None:
        block_budget = max(4096, min(int(target_block_bytes), block_budget))

    rows_budget = max(sublane,
                      (block_budget // (f_pad * itemsize)) // sublane * sublane)
    rows_cap = max(sublane, (M // sublane) * sublane)   # never exceed the data
    tm = min(rows_cap, rows_budget)

    # Row sub-chunk walked inside the kernel: ~16 loaded vregs per operand.
    chunk = min(sublane * max(1, 16 // lane_tiles), tm)
    tm = (tm // chunk) * chunk                          # chunk divides tm

    tiles = pl.cdiv(M, tm)
    splits = num_cores if (num_cores > 1 and tiles >= num_cores) else 1
    block_bytes = tm * f_pad * itemsize                 # lane-padded VMEM bytes

    def _run(n_splits: int):
        tps = pl.cdiv(tiles, n_splits)
        last_blk = tiles - 1
        if n_splits * tps == tiles:
            # Grid covers exactly `tiles` blocks; no clamping needed.
            in_index = lambda c, t: (c * tps + t, 0)
        else:
            # Ragged split: clamp logically-out-of-range blocks onto the last
            # real block; the in-kernel row mask zeroes their contribution.
            in_index = lambda c, t: (jnp.minimum(c * tps + t, last_blk), 0)

        in_spec = pl.BlockSpec((tm, F), in_index)
        # Per-split (8, F) partial sums; block index constant along t, so the
        # output block stays VMEM-resident and acts as the accumulator.
        out_spec = pl.BlockSpec((8, F), lambda c, t: (c, 0))
        out_sds = jax.ShapeDtypeStruct((n_splits * 8, F), jnp.float32)

        out_bytes = 2 * 2 * 8 * f_pad * 4
        vmem_limit = 2 * 2 * block_bytes + out_bytes + (6 << 20)
        vmem_limit = max(16 << 20, min(vmem_limit, vmem_cap - (4 << 20)))

        dim_sem = (
            pltpu.CORE_PARALLEL if n_splits > 1 else pltpu.ARBITRARY,
            pltpu.ARBITRARY,
        )
        cost = pl.CostEstimate(
            flops=5 * N,
            transcendentals=0,
            bytes_accessed=2 * N * itemsize + 2 * n_splits * 8 * F * 4,
        )

        kernel = _make_kernel(M, tm, tps, chunk, F)
        return pl.pallas_call(
            kernel,
            out_shape=(out_sds, out_sds),
            grid_spec=pltpu.PrefetchScalarGridSpec(
                num_scalar_prefetch=0,
                grid=(n_splits, tps),
                in_specs=[in_spec, in_spec],
                out_specs=[out_spec, out_spec],
            ),
            compiler_params=pltpu.CompilerParams(
                dimension_semantics=dim_sem,
                vmem_limit_bytes=int(vmem_limit),
            ),
            cost_estimate=cost,
        )(x2, y2)

    if splits > 1:
        try:
            num_parts, den_parts = _run(splits)
        except Exception:
            # CORE_PARALLEL unavailable on this part / build: run the same
            # kernel as a single sequential split (still correct).
            num_parts, den_parts = _run(1)
    else:
        num_parts, den_parts = _run(1)

    # Final tiny combine (once) in the wrapper: sqrt(sum num) / sqrt(sum den).
    num_total = jnp.sum(num_parts)
    den_total = jnp.sum(den_parts)
    return jnp.sqrt(num_total) / jnp.sqrt(den_total)


def _reference(x_mag, y_mag):
    xf = x_mag.astype(jnp.float32)
    yf = y_mag.astype(jnp.float32)
    return jnp.linalg.norm((yf - xf).ravel()) / jnp.linalg.norm(yf.ravel())


if __name__ == "__main__":
    key = jax.random.PRNGKey(0)
    kx, ky, kx2, ky2, kx3, ky3 = jax.random.split(key, 6)

    # Test 1: small spectrogram, single tile, single chunk.
    B, T, F = 2, 16, 128
    x_mag = jnp.abs(jax.random.normal(kx, (B, T, F), dtype=jnp.float32))
    y_mag = jnp.abs(jax.random.normal(ky, (B, T, F), dtype=jnp.float32))
    loss = spectral_convergence_loss(x_mag, y_mag)
    jax.block_until_ready(loss)
    ref = _reference(x_mag, y_mag)
    assert jnp.allclose(loss, ref, rtol=1e-5, atol=1e-6), (loss, ref)

    # Test 2: force the multi-tile path with a partial (masked) tail tile.
    B2, T2, F2 = 2, 60, 128
    x2 = jnp.abs(jax.random.normal(kx2, (B2, T2, F2), dtype=jnp.float32))
    y2 = jnp.abs(jax.random.normal(ky2, (B2, T2, F2), dtype=jnp.float32))
    loss2 = spectral_convergence_loss(x2, y2, target_block_bytes=32 * 1024)
    jax.block_until_ready(loss2)
    ref2 = _reference(x2, y2)
    assert jnp.allclose(loss2, ref2, rtol=1e-5, atol=1e-6), (loss2, ref2)

    # Test 3: bf16 inputs + F not a multiple of 128 + masked tail tile.
    B3, T3, F3 = 2, 50, 96
    x3 = jnp.abs(jax.random.normal(kx3, (B3, T3, F3))).astype(jnp.bfloat16)
    y3 = jnp.abs(jax.random.normal(ky3, (B3, T3, F3))).astype(jnp.bfloat16)
    loss3 = spectral_convergence_loss(x3, y3, target_block_bytes=16 * 1024)
    jax.block_until_ready(loss3)
    ref3 = _reference(x3, y3)
    assert jnp.allclose(loss3, ref3, rtol=1e-5, atol=1e-6), (loss3, ref3)

    print("KERNEL_OK")
</pallas_src>

<mosaic_0001>
module attributes {stable_mosaic.version = 11 : i64} {
  func.func @kernel(%arg0: i32, %arg1: i32, %arg2: memref<32x128xf32, #tpu.memory_space<vmem>>, %arg3: memref<32x128xf32, #tpu.memory_space<vmem>>, %arg4: memref<8x128xf32, #tpu.memory_space<vmem>>, %arg5: memref<8x128xf32, #tpu.memory_space<vmem>>) attributes {dimension_semantics = [#tpu.dimension_semantics<arbitrary>, #tpu.dimension_semantics<arbitrary>], iteration_bounds = array<i64: 1, 1>, scalar_prefetch = 0 : i64, scratch_operands = 0 : i64, tpu.core_type = #tpu.core_type<tc>, window_params = [{transform_indices = @transform_0, window_bounds = array<i64: 32, 128>}, {transform_indices = @transform_1, window_bounds = array<i64: 32, 128>}, {transform_indices = @transform_2, window_bounds = array<i64: 8, 128>}, {transform_indices = @transform_3, window_bounds = array<i64: 8, 128>}]} {
    %c0_i32 = arith.constant 0 : i32
    %0 = arith.cmpi eq, %arg1, %c0_i32 : i32
    %1 = arith.extui %0 : i1 to i32
    %c0_i32_0 = arith.constant 0 : i32
    %2 = arith.cmpi ne, %1, %c0_i32_0 : i32
    scf.if %2 {
      %cst_18 = arith.constant 0.000000e+00 : f32
      %41 = vector.broadcast %cst_18 : f32 to vector<8x128xf32>
      %c0_19 = arith.constant 0 : index
      %c0_20 = arith.constant 0 : index
      %42 = vector.load %arg4[%c0_19, %c0_20] : memref<8x128xf32, #tpu.memory_space<vmem>>, vector<8x128xf32>
      tpu.vector_store %arg4[%c0_19, %c0_20], %41 {strides = array<i32>} : memref<8x128xf32, #tpu.memory_space<vmem>>, vector<8x128xf32>,
      %cst_21 = arith.constant 0.000000e+00 : f32
      %43 = vector.broadcast %cst_21 : f32 to vector<8x128xf32>
      %c0_22 = arith.constant 0 : index
      %c0_23 = arith.constant 0 : index
      %44 = vector.load %arg5[%c0_22, %c0_23] : memref<8x128xf32, #tpu.memory_space<vmem>>, vector<8x128xf32>
      tpu.vector_store %arg5[%c0_22, %c0_23], %43 {strides = array<i32>} : memref<8x128xf32, #tpu.memory_space<vmem>>, vector<8x128xf32>,
    } else {
    }
    %c1_i32 = arith.constant 1 : i32
    %3 = arith.muli %arg0, %c1_i32 : i32
    %4 = arith.addi %3, %arg1 : i32
    %c32_i32 = arith.constant 32 : i32
    %5 = arith.muli %4, %c32_i32 : i32
    %c32_i32_1 = arith.constant 32 : i32
    %6 = arith.subi %c32_i32_1, %5 : i32
    %cst = arith.constant 0.000000e+00 : f32
    %7 = vector.broadcast %cst : f32 to vector<8x128xf32>
    %c0_i32_2 = arith.constant 0 : i32
    %c32_i32_3 = arith.constant 32 : i32
    %8 = arith.muli %c0_i32_2, %c32_i32_3 : i32
    %9 = tpu.assume_multiple %8, 32 : i32
    %10 = arith.index_cast %9 : i32 to index
    %c0 = arith.constant 0 : index
    %11 = vector.load %arg2[%10, %c0] : memref<32x128xf32, #tpu.memory_space<vmem>>, vector<32x128xf32>
    %12 = arith.index_cast %9 : i32 to index
    %c0_4 = arith.constant 0 : index
    %13 = vector.load %arg3[%12, %c0_4] : memref<32x128xf32, #tpu.memory_space<vmem>>, vector<32x128xf32>
    %14 = tpu.iota {dimensions = array<i32: 0>} : vector<32x1xi32>
    %15 = arith.subi %6, %9 : i32
    %16 = vector.broadcast %15 : i32 to vector<32x1xi32>
    %17 = arith.cmpi slt, %14, %16 : vector<32x1xi32>
    %18 = arith.subf %13, %11 : vector<32x128xf32>
    %19 = arith.mulf %18, %18 : vector<32x128xf32>
    %cst_5 = arith.constant 0.000000e+00 : f32
    %20 = vector.shape_cast %17 : vector<32x1xi1> to vector<32x1xi1>
    %21 = vector.broadcast %20 : vector<32x1xi1> to vector<32x128xi1>
    %22 = vector.broadcast %cst_5 : f32 to vector<32x128xf32>
    %23 = arith.select %21, %19, %22 : vector<32x128xi1>, vector<32x128xf32>
    %24 = arith.mulf %13, %13 : vector<32x128xf32>
    %cst_6 = arith.constant 0.000000e+00 : f32
    %25 = vector.shape_cast %17 : vector<32x1xi1> to vector<32x1xi1>
    %26 = vector.broadcast %25 : vector<32x1xi1> to vector<32x128xi1>
    %27 = vector.broadcast %cst_6 : f32 to vector<32x128xf32>
    %28 = arith.select %26, %24, %27 : vector<32x128xi1>, vector<32x128xf32>
    %29 = vector.shape_cast %23 : vector<32x128xf32> to vector<4x8x128xf32>
    %cst_7 = arith.constant dense<0.000000e+00> : vector<8x128xf32>
    %30 = vector.multi_reduction <add>, %29, %cst_7 [0] : vector<4x8x128xf32> to vector<8x128xf32>
    %31 = arith.addf %7, %30 : vector<8x128xf32>
    %32 = vector.shape_cast %28 : vector<32x128xf32> to vector<4x8x128xf32>
    %cst_8 = arith.constant dense<0.000000e+00> : vector<8x128xf32>
    %33 = vector.multi_reduction <add>, %32, %cst_8 [0] : vector<4x8x128xf32> to vector<8x128xf32>
    %34 = arith.addf %7, %33 : vector<8x128xf32>
    %c1_i32_9 = arith.constant 1 : i32
    %c0_10 = arith.constant 0 : index
    %c0_11 = arith.constant 0 : index
    %35 = vector.load %arg4[%c0_10, %c0_11] : memref<8x128xf32, #tpu.memory_space<vmem>>, vector<8x128xf32>
    %36 = arith.addf %35, %31 : vector<8x128xf32>
    %c0_12 = arith.constant 0 : index
    %c0_13 = arith.constant 0 : index
    %37 = vector.load %arg4[%c0_12, %c0_13] : memref<8x128xf32, #tpu.memory_space<vmem>>, vector<8x128xf32>
    tpu.vector_store %arg4[%c0_12, %c0_13], %36 {strides = array<i32>} : memref<8x128xf32, #tpu.memory_space<vmem>>, vector<8x128xf32>,
    %c0_14 = arith.constant 0 : index
    %c0_15 = arith.constant 0 : index
    %38 = vector.load %arg5[%c0_14, %c0_15] : memref<8x128xf32, #tpu.memory_space<vmem>>, vector<8x128xf32>
    %39 = arith.addf %38, %34 : vector<8x128xf32>
    %c0_16 = arith.constant 0 : index
    %c0_17 = arith.constant 0 : index
    %40 = vector.load %arg5[%c0_16, %c0_17] : memref<8x128xf32, #tpu.memory_space<vmem>>, vector<8x128xf32>
    tpu.vector_store %arg5[%c0_16, %c0_17], %39 {strides = array<i32>} : memref<8x128xf32, #tpu.memory_space<vmem>>, vector<8x128xf32>,
    return
  }
  func.func @transform_0(%arg0: i32, %arg1: i32) -> (i32, i32) {
    %c1_i32 = arith.constant 1 : i32
    %0 = arith.muli %arg0, %c1_i32 : i32
    %1 = arith.addi %0, %arg1 : i32
    %c0_i32 = arith.constant 0 : i32
    %c0_i32_0 = arith.constant 0 : i32
    return %1, %c0_i32 : i32, i32
  }
  func.func @transform_1(%arg0: i32, %arg1: i32) -> (i32, i32) {
    %c1_i32 = arith.constant 1 : i32
    %0 = arith.muli %arg0, %c1_i32 : i32
    %1 = arith.addi %0, %arg1 : i32
    %c0_i32 = arith.constant 0 : i32
    %c0_i32_0 = arith.constant 0 : i32
    return %1, %c0_i32 : i32, i32
  }
  func.func @transform_2(%arg0: i32, %arg1: i32) -> (i32, i32) {
    %c0_i32 = arith.constant 0 : i32
    %c0_i32_0 = arith.constant 0 : i32
    return %arg0, %c0_i32 : i32, i32
  }
  func.func @transform_3(%arg0: i32, %arg1: i32) -> (i32, i32) {
    %c0_i32 = arith.constant 0 : i32
    %c0_i32_0 = arith.constant 0 : i32
    return %arg0, %c0_i32 : i32, i32
  }
}

</mosaic_0001>

<llo_original>
// kernel: tpu_custom_call.1
$region0: #{tpu_custom_call.1}
  #allocation0 [shape = 'u32[]', space=smem, size = 0x4, offset = 0x4, fixed_abs, tag = 'smem constant byte address 0x4 - core index']
  #allocation1 [shape = 'u32[144,128]{1,0:T(1,128)}', space=vmem, size = 0x12000, scoped, tag = 'internal scratch']
  %s0 = inlined_call_operand.hbm [shape: f32[32,128], index: 0, kind: input, shape index: {}]
  %s1 = inlined_call_operand.hbm [shape: f32[32,128], index: 1, kind: input, shape index: {}]
  %s2 = inlined_call_operand.hbm [shape: f32[8,128], index: 2, kind: output, shape index: {0}]
  %s3 = inlined_call_operand.hbm [shape: f32[8,128], index: 3, kind: output, shape index: {1}]
  %4 = xla_tuple %s2, %s3
  %s5 = sld [smem:[#allocation0]]
  $region38: #{tpu_custom_call.1} parent=0
    _
  %s7 = ssub.s32 1, %s5
  %s8 = scalar_select 0, %s7, %s5
  $region1: #{tpu_custom_call.1} parent=0
    #allocation2 [shape = 'u8[16384]{0}', space=vmem, size = 0x4000, scoped, tag = 'input window, operand 0, single buffered']
    #allocation3 [shape = 's32[1]{0}', space=sflag, size = 0x4, scoped, tag = 'scoped memory for tpu_custom_call.1']
    #allocation4 [shape = 's32[1]{0}', space=sflag, size = 0x4, scoped, tag = 'scoped memory for tpu_custom_call.1']
    #allocation5 [shape = 'u8[16384]{0}', space=vmem, size = 0x4000, scoped, tag = 'input window, operand 1, single buffered']
    #allocation6 [shape = 's32[1]{0}', space=sflag, size = 0x4, scoped, tag = 'scoped memory for tpu_custom_call.1']
    #allocation7 [shape = 'u8[4096]{0}', space=vmem, size = 0x1000, scoped, tag = 'output window, operand 0, single buffered']
    #allocation8 [shape = 'u8[4096]{0}', space=vmem, size = 0x1000, scoped, tag = 'output window, operand 1, single buffered']
    #allocation9 [shape = 's32[1]{0}', space=sflag, size = 0x4, scoped, tag = 'scoped memory for tpu_custom_call.1']
    %9 = vsyncpa [#allocation3], 0
    %10 = vsyncpa [#allocation6], 0
    %11 = vsyncpa [#allocation4], 0
    %12 = vsyncpa [#allocation9], 0
    // Predicated region
    $region2: #{tpu_custom_call.1} parent=1 // pred_check
      _
    $region3: #{tpu_custom_call.1} parent=1 // pred_check_branch
      %14 = sbr.rel (0) target = $region5
    $region4: #{tpu_custom_call.1} parent=1 // pred_region
      %s15 = sadd.s32 0, 0
      %s16 = smul.u32 4, %s15
      %s18 = ssub.s32 512, 512
      %19 = vsyncadd [#allocation3], %s18
      %s20 = smul.addr %s16, 128
      %s21 = scalar_lea.hbm %s0, %s20
      %s22 = sshll.u32 [#allocation2], 4
      %s23 = int_to_ptr.vmem [resolvable:$true] %s22
      %28 = dma.hbm_to_vmem [thread:$0]  %s21, 512, %s23, [#allocation3], 128, 128, 8
    $region5: #{tpu_custom_call.1} parent=1 // pred_fallthru
      _
    // Predicated region
    $region6: #{tpu_custom_call.1} parent=1 // pred_check
      _
    $region7: #{tpu_custom_call.1} parent=1 // pred_check_branch
      %30 = sbr.rel (0) target = $region9
    $region8: #{tpu_custom_call.1} parent=1 // pred_region
      %s31 = sadd.s32 0, 0
      %s32 = smul.u32 4, %s31
      %s34 = ssub.s32 512, 512
      %35 = vsyncadd [#allocation6], %s34
      %s36 = smul.addr %s32, 128
      %s37 = scalar_lea.hbm %s1, %s36
      %s38 = sshll.u32 [#allocation5], 4
      %s39 = int_to_ptr.vmem [resolvable:$true] %s38
      %44 = dma.hbm_to_vmem [thread:$0]  %s37, 512, %s39, [#allocation6], 128, 128, 8
    $region9: #{tpu_custom_call.1} parent=1 // pred_fallthru
      _
    // Predicated region
    $region10: #{tpu_custom_call.1} parent=1 // pred_check
      _
    $region11: #{tpu_custom_call.1} parent=1 // pred_check_branch
      %46 = sbr.rel (0) target = $region13
    $region12: #{tpu_custom_call.1} parent=1 // pred_region
      %47 = dma.done [#allocation3], 512
    $region13: #{tpu_custom_call.1} parent=1 // pred_fallthru
      _
    // Predicated region
    $region14: #{tpu_custom_call.1} parent=1 // pred_check
      _
    $region15: #{tpu_custom_call.1} parent=1 // pred_check_branch
      %49 = sbr.rel (0) target = $region17
    $region16: #{tpu_custom_call.1} parent=1 // pred_region
      %50 = dma.done [#allocation6], 512
    $region17: #{tpu_custom_call.1} parent=1 // pred_fallthru
      _
    %s51 = sadd.s32 0, 0
    %s52 = smul.u32 4, %s51
    %s53 = sadd.s32 0, 0
    %s54 = smul.u32 4, %s53
    %p55 = scmp.eq.s32.totalorder 0, 0
    // Predicated region
    $region18: #{tpu_custom_call.1} parent=1 // pred_check
      %p56 = pneg %p55
    $region19: #{tpu_custom_call.1} parent=1 // pred_check_branch
      %58 = sbr.rel (%p56) target = $region21
    $region20: #{tpu_custom_call.1} parent=1 // pred_region
      %59 = vst [vmem:[#allocation7] sm:$0xff] 0.0
      %60 = vst [vmem:[#allocation8] sm:$0xff] 0.0
    $region21: #{tpu_custom_call.1} parent=1 // pred_fallthru
      _
    %s61 = sadd.s32 0, 0
    %s62 = smul.u32 %s61, 32
    %s63 = ssub.s32 32, %s62
    %v64 = vld [vmem:[#allocation2] sm:$0xff]
    %v65 = vld [vmem:[#allocation2 + $0x8] sm:$0xff]
    %v66 = vld [vmem:[#allocation2 + $0x10] sm:$0xff]
    %v67 = vld [vmem:[#allocation2 + $0x18] sm:$0xff]
    %v68 = vld [vmem:[#allocation5] sm:$0xff]
    %v69 = vld [vmem:[#allocation5 + $0x8] sm:$0xff]
    %v70 = vld [vmem:[#allocation5 + $0x10] sm:$0xff]
    %v71 = vld [vmem:[#allocation5 + $0x18] sm:$0xff]
    %v72 = vlaneseq
    %v73 = vshrl.u32 %v72, 7
    %v74 = vadd.s32 %v73, 8
    %v75 = vadd.s32 %v73, 16
    %v76 = vadd.s32 %v73, 24
    %s77 = ssub.s32 %s63, 0
    %v78 = vstv %s77
    %vm79 = vcmp.lt.s32.totalorder %v73, %v78
    %vm80 = vcmp.lt.s32.totalorder %v74, %v78
    %vm81 = vcmp.lt.s32.totalorder %v75, %v78
    %vm82 = vcmp.lt.s32.totalorder %v76, %v78
    %v83 = vsub.f32 %v68, %v64
    %v84 = vsub.f32 %v69, %v65
    %v85 = vsub.f32 %v70, %v66
    %v86 = vsub.f32 %v71, %v67
    %v87 = vmul.f32 %v83, %v83
    %v88 = vmul.f32 %v84, %v84
    %v89 = vmul.f32 %v85, %v85
    %v90 = vmul.f32 %v86, %v86
    %v91 = vsel %vm79, 1, 0
    %v92 = vsel %vm80, 1, 0
    %v93 = vsel %vm81, 1, 0
    %v94 = vsel %vm82, 1, 0
    %vm95 = vcmp.eq.s32.totalorder %v91, 1
    %vm96 = vcmp.eq.s32.totalorder %v92, 1
    %vm97 = vcmp.eq.s32.totalorder %v93, 1
    %vm98 = vcmp.eq.s32.totalorder %v94, 1
    %v99 = vsel %vm95, %v87, 0.0
    %v100 = vsel %vm96, %v88, 0.0
    %v101 = vsel %vm97, %v89, 0.0
    %v102 = vsel %vm98, %v90, 0.0
    %v103 = vmul.f32 %v68, %v68
    %v104 = vmul.f32 %v69, %v69
    %v105 = vmul.f32 %v70, %v70
    %v106 = vmul.f32 %v71, %v71
    %v107 = vsel %vm95, %v103, 0.0
    %v108 = vsel %vm96, %v104, 0.0
    %v109 = vsel %vm97, %v105, 0.0
    %v110 = vsel %vm98, %v106, 0.0
    %v111 = vadd.f32 %v99, %v100
    %v112 = vadd.f32 %v111, %v101
    %v113 = vadd.f32 %v112, %v102
    %v114 = vadd.f32 %v113, 0.0
    %v115 = vadd.f32 %v107, %v108
    %v116 = vadd.f32 %v115, %v109
    %v117 = vadd.f32 %v116, %v110
    %v118 = vadd.f32 %v117, 0.0
    %v119 = vld [vmem:[#allocation7] sm:$0xff]
    %v120 = vadd.f32 %v119, %v114
    %121 = vst [vmem:[#allocation7] sm:$0xff] %v120
    %v122 = vld [vmem:[#allocation8] sm:$0xff]
    %v123 = vadd.f32 %v122, %v118
    %124 = vst [vmem:[#allocation8] sm:$0xff] %v123
    // Predicated region
    $region22: #{tpu_custom_call.1} parent=1 // pred_check
      _
    $region23: #{tpu_custom_call.1} parent=1 // pred_check_branch
      %126 = sbr.rel (0) target = $region25
    $region24: #{tpu_custom_call.1} parent=1 // pred_region
      %s128 = ssub.s32 128, 128
      %129 = vsyncadd [#allocation4], %s128
      %s131 = sshll.u32 [#allocation7], 4
      %s132 = int_to_ptr.vmem [resolvable:$true] %s131
      %134 = dma.vmem_to_hbm [thread:$0]  %s132, 128, %s2, [#allocation4]
    $region25: #{tpu_custom_call.1} parent=1 // pred_fallthru
      _
    // Predicated region
    $region26: #{tpu_custom_call.1} parent=1 // pred_check
      _
    $region27: #{tpu_custom_call.1} parent=1 // pred_check_branch
      %136 = sbr.rel (0) target = $region29
    $region28: #{tpu_custom_call.1} parent=1 // pred_region
      %s138 = ssub.s32 128, 128
      %139 = vsyncadd [#allocation9], %s138
      %s141 = sshll.u32 [#allocation8], 4
      %s142 = int_to_ptr.vmem [resolvable:$true] %s141
      %144 = dma.vmem_to_hbm [thread:$0]  %s142, 128, %s3, [#allocation9]
    $region29: #{tpu_custom_call.1} parent=1 // pred_fallthru
      _
    // Predicated region
    $region30: #{tpu_custom_call.1} parent=1 // pred_check
      _
    $region31: #{tpu_custom_call.1} parent=1 // pred_check_branch
      %146 = sbr.rel (0) target = $region33
    $region32: #{tpu_custom_call.1} parent=1 // pred_region
      %147 = dma.done [#allocation4], 128
    $region33: #{tpu_custom_call.1} parent=1 // pred_fallthru
      _
    // Predicated region
    $region34: #{tpu_custom_call.1} parent=1 // pred_check
      _
    $region35: #{tpu_custom_call.1} parent=1 // pred_check_branch
      %149 = sbr.rel (0) target = $region37
    $region36: #{tpu_custom_call.1} parent=1 // pred_region
      %150 = dma.done [#allocation9], 128
    $region37: #{tpu_custom_call.1} parent=1 // pred_fallthru
      _
    %151 = vsyncpa [#allocation3], 1
    %152 = vsyncpa [#allocation6], 1
    %153 = vsyncpa [#allocation4], 1
    %154 = vsyncpa [#allocation9], 1

</llo_original>
